<compile_context>
chip_gen: v6e
topology: v6e:2x2x1
jax: 0.10.0
libtpu: 0.0.40
codegen_flags: <defaults>
</compile_context>

<pallas_src>
import functools

import jax
import jax.numpy as jnp
from jax import lax
from jax.experimental import pallas as pl
from jax.experimental.pallas import tpu as pltpu


def _focal_loss_kernel(logits_ref, target_ref, out_ref, acc_ref, *,
                       alpha, gamma, hw, tile, targets_are_indices,
                       strict_one_hot, masked):
    j = pl.program_id(2)
    n_inner = pl.num_programs(2)

    @pl.when(j == 0)
    def _():
        acc_ref[...] = jnp.zeros_like(acc_ref)

    logits = logits_ref[0].astype(jnp.float32)        # (C, TILE) classes x pixels
    c = logits.shape[0]

    # log-sum-exp over the class (sublane) axis.
    m = jnp.max(logits, axis=0, keepdims=True)        # (1, TILE)
    e = jnp.exp(logits - m)                           # (C, TILE): the one big EUP exp
    sum_exp = jnp.sum(e, axis=0, keepdims=True)       # (1, TILE)

    if targets_are_indices:
        idx = target_ref[0].astype(jnp.int32)         # (1, TILE)
        class_iota = lax.broadcasted_iota(jnp.int32, logits.shape, 0)
        logit_t = jnp.sum(jnp.where(class_iota == idx, logits, 0.0),
                          axis=0, keepdims=True)
    elif strict_one_hot:
        # Strict one-hot targets: selecting the target logit is a single
        # multiply + cross-sublane sum (no argmax, no big int/bool temporaries).
        onehot = target_ref[0].astype(jnp.float32)    # (C, TILE)
        logit_t = jnp.sum(onehot * logits, axis=0, keepdims=True)
    else:
        # Fallback matching torch.argmax tie-breaking (lowest index) for
        # targets that are not guaranteed strict one-hot (e.g. label smoothing).
        onehot = target_ref[0].astype(jnp.float32)
        class_iota = lax.broadcasted_iota(jnp.int32, logits.shape, 0)
        mx = jnp.max(onehot, axis=0, keepdims=True)
        idx = jnp.min(jnp.where(onehot == mx, class_iota, c),
                      axis=0, keepdims=True)
        logit_t = jnp.sum(jnp.where(class_iota == idx, logits, 0.0),
                          axis=0, keepdims=True)

    ce = (m - logit_t) + jnp.log(sum_exp)             # (1, TILE), >= 0
    pt = jnp.exp(-ce)                                 # exact; one small EUP exp

    base = jnp.maximum(1.0 - pt, 0.0)                 # guard tiny negatives
    if gamma == 0.0:
        pow_term = jnp.ones_like(base)
    elif gamma == 1.0:
        pow_term = base
    elif gamma == 1.5:
        pow_term = base * jnp.sqrt(base)              # avoids exp/log pow
    elif gamma == 2.0:
        pow_term = base * base
    else:
        pow_term = jnp.where(
            base > 0.0, jnp.exp(gamma * jnp.log(jnp.maximum(base, 1e-30))), 0.0)

    focal = alpha * pow_term * ce                     # (1, TILE)

    if masked:
        # Trailing partial block: out-of-range lanes hold garbage; must be a
        # select (NaN/Inf in the dead branch is dropped), not a multiply.
        b = pl.program_id(1) * n_inner + j            # global pixel-block index
        lane = lax.broadcasted_iota(jnp.int32, focal.shape, 1)
        focal = jnp.where(b * tile + lane < hw, focal, 0.0)

    # Cheap per-step VPU add into per-lane partial sums.
    acc_ref[...] += focal

    @pl.when(j == n_inner - 1)
    def _():
        out_ref[...] = jnp.full(out_ref.shape, jnp.sum(acc_ref[...]),
                                dtype=out_ref.dtype)


def _focal_loss_call(x, t, *, alpha, gamma, targets_are_indices, strict_one_hot):
    """x: (N, C, HW) logits.  t: (N, C, HW) one-hot or (N, 1, HW) int32 indices."""
    n, c, hw = x.shape
    p = n * hw

    # --- per-chip tile / VMEM sizing ------------------------------------------
    try:
        vmem_cap = int(pltpu.get_tpu_info().vmem_capacity_bytes)
    except Exception:  # no query available; conservative (v7x-sized) default
        vmem_cap = 64 * 1024 * 1024
    budget = min(24 * 1024 * 1024, vmem_cap // 3)     # block working-set target

    tgt_lane_bytes = 4 if targets_are_indices else c * t.dtype.itemsize
    per_lane = (2 * c * x.dtype.itemsize              # double-buffered logits block
                + 2 * tgt_lane_bytes                  # double-buffered target block
                + (2 * c + 8) * 4                     # f32 working temporaries
                + 8 * 4)                              # (1,tile) acc, 8-sublane padded
    cap_lanes = max(128, (budget // per_lane) // 128 * 128)
    cap_lanes = min(cap_lanes, 128 * 1024)

    if hw <= 128:
        tile = hw                                      # block == full dim, no mask
    else:
        tile = int(min(cap_lanes, (hw // 128) * 128))  # largest aligned tile <= hw
    nb = pl.cdiv(hw, tile)
    masked = (hw % tile) != 0                          # trailing partial block

    # Outer "parallel" pixel-block axis so both v7x TensorCores get work when
    # N == 1 (harmless extra grid axis on single-core v5e/v6e).
    num_outer = 2 if (nb % 2 == 0 and nb >= 2) else 1
    num_inner = nb // num_outer

    vmem_limit = int(min(vmem_cap // 2, max(2 * budget, 32 * 1024 * 1024)))

    out_bytes = n * num_outer * 8 * 128 * 4
    cost = pl.CostEstimate(
        flops=int(10 * c * p),
        transcendentals=int((c + 2) * p),
        bytes_accessed=int(x.size * x.dtype.itemsize
                           + t.size * t.dtype.itemsize + out_bytes))

    kernel = functools.partial(
        _focal_loss_kernel, alpha=float(alpha), gamma=float(gamma),
        hw=hw, tile=tile, targets_are_indices=targets_are_indices,
        strict_one_hot=strict_one_hot, masked=masked)

    logits_spec = pl.BlockSpec(
        (1, c, tile), lambda i, o, j, ni=num_inner: (i, 0, o * ni + j))
    if targets_are_indices:
        tgt_spec = pl.BlockSpec(
            (1, 1, tile), lambda i, o, j, ni=num_inner: (i, 0, o * ni + j))
    else:
        tgt_spec = pl.BlockSpec(
            (1, c, tile), lambda i, o, j, ni=num_inner: (i, 0, o * ni + j))

    partials = pl.pallas_call(
        kernel,
        out_shape=jax.ShapeDtypeStruct((n, num_outer, 8, 128), jnp.float32),
        grid_spec=pltpu.PrefetchScalarGridSpec(
            num_scalar_prefetch=0,
            grid=(n, num_outer, num_inner),
            in_specs=[logits_spec, tgt_spec],
            out_specs=pl.BlockSpec((1, 1, 8, 128), lambda i, o, j: (i, o, 0, 0)),
            scratch_shapes=[pltpu.VMEM((1, tile), jnp.float32)],
        ),
        compiler_params=pltpu.CompilerParams(
            dimension_semantics=("parallel", "parallel", "arbitrary"),
            vmem_limit_bytes=vmem_limit),
        cost_estimate=cost,
    )(x, t)

    return jnp.sum(partials[:, :, 0, 0]) / p


def focal_loss(logits, target_one_hot, alpha=0.25, gamma=1.5,
               strict_one_hot=True):
    """Module-equivalent entry point: (N, C, H, W) logits + one-hot targets.

    The one-hot is streamed in its native dtype (pass bf16/int8 upstream to
    shrink HBM traffic). `strict_one_hot=False` restores exact argmax semantics
    for non-strict targets.
    """
    # TODO(synk): ignore_index is None in the module (no pixels ignored), so it
    # is not plumbed into the kernel.
    n, c, h, w = logits.shape
    x = logits.reshape(n, c, h * w)            # pure reshape, no extra HBM pass
    t = target_one_hot.reshape(n, c, h * w)    # native dtype, no astype
    return _focal_loss_call(x, t, alpha=alpha, gamma=gamma,
                            targets_are_indices=False,
                            strict_one_hot=strict_one_hot)


def focal_loss_from_indices(logits, target_indices, alpha=0.25, gamma=1.5):
    """Fast path: class-index targets (N, H, W) -> ~halves target HBM traffic."""
    n, c, h, w = logits.shape
    x = logits.reshape(n, c, h * w)
    t = target_indices.reshape(n, 1, h * w).astype(jnp.int32)
    return _focal_loss_call(x, t, alpha=alpha, gamma=gamma,
                            targets_are_indices=True, strict_one_hot=True)


def _reference_focal_loss(logits, target_one_hot, alpha=0.25, gamma=1.5):
    # pure-JAX reference mirroring the PyTorch module
    tgt = jnp.argmax(target_one_hot, axis=1)                       # (N, H, W)
    lse = jax.nn.logsumexp(logits.astype(jnp.float32), axis=1)     # (N, H, W)
    logit_t = jnp.take_along_axis(
        logits.astype(jnp.float32), tgt[:, None], axis=1)[:, 0]
    ce = lse - logit_t
    pt = jnp.exp(-ce)
    focal = alpha * jnp.power(1.0 - pt, gamma) * ce
    return jnp.mean(focal)


if __name__ == "__main__":
    key = jax.random.PRNGKey(0)
    k1, k2 = jax.random.split(key)

    N, C, H, W = 2, 4, 16, 16
    logits = jax.random.normal(k1, (N, C, H, W), dtype=jnp.float32)
    classes = jax.random.randint(k2, (N, H, W), 0, C)
    target_one_hot = jax.nn.one_hot(classes, C, axis=1, dtype=jnp.float32)

    ref = jax.block_until_ready(_reference_focal_loss(logits, target_one_hot))

    # Module-equivalent (one-hot) path.
    loss = jax.block_until_ready(focal_loss(logits, target_one_hot))
    assert jnp.isfinite(loss), "non-finite loss"
    assert jnp.allclose(loss, ref, rtol=1e-4, atol=1e-6), (loss, ref)

    # Index-target fast path.
    loss_idx = jax.block_until_ready(focal_loss_from_indices(logits, classes))
    assert jnp.allclose(loss_idx, ref, rtol=1e-4, atol=1e-6), (loss_idx, ref)

    print("KERNEL_OK")
</pallas_src>

<mosaic_0001>
module attributes {stable_mosaic.version = 11 : i64} {
  func.func @_focal_loss_kernel(%arg0: i32, %arg1: i32, %arg2: i32, %arg3: memref<1x4x256xf32, #tpu.memory_space<vmem>>, %arg4: memref<1x4x256xf32, #tpu.memory_space<vmem>>, %arg5: memref<1x1x8x128xf32, #tpu.memory_space<vmem>>, %arg6: memref<1x256xf32, #tpu.memory_space<vmem>>) attributes {dimension_semantics = [#tpu.dimension_semantics<parallel>, #tpu.dimension_semantics<parallel>, #tpu.dimension_semantics<arbitrary>], iteration_bounds = array<i64: 2, 1, 1>, scalar_prefetch = 0 : i64, scratch_operands = 1 : i64, tpu.core_type = #tpu.core_type<tc>, window_params = [{transform_indices = @transform_0, window_bounds = array<i64: 1, 4, 256>}, {transform_indices = @transform_1, window_bounds = array<i64: 1, 4, 256>}, {transform_indices = @transform_2, window_bounds = array<i64: 1, 1, 8, 128>}]} {
    %c0_i32 = arith.constant 0 : i32
    %0 = arith.cmpi eq, %arg2, %c0_i32 : i32
    %1 = arith.extui %0 : i1 to i32
    %c0_i32_0 = arith.constant 0 : i32
    %2 = arith.cmpi ne, %1, %c0_i32_0 : i32
    scf.if %2 {
      %cst_18 = arith.constant 0.000000e+00 : f32
      %38 = vector.broadcast %cst_18 : f32 to vector<1x256xf32>
      %c0_19 = arith.constant 0 : index
      %c0_20 = arith.constant 0 : index
      %39 = vector.load %arg6[%c0_19, %c0_20] : memref<1x256xf32, #tpu.memory_space<vmem>>, vector<1x256xf32>
      tpu.vector_store %arg6[%c0_19, %c0_20], %38 {strides = array<i32>} : memref<1x256xf32, #tpu.memory_space<vmem>>, vector<1x256xf32>,
    } else {
    }
    %c0 = arith.constant 0 : index
    %c0_1 = arith.constant 0 : index
    %c0_2 = arith.constant 0 : index
    %3 = vector.load %arg3[%c0, %c0_1, %c0_2] : memref<1x4x256xf32, #tpu.memory_space<vmem>>, vector<1x4x256xf32>
    %4 = vector.shape_cast %3 : vector<1x4x256xf32> to vector<4x256xf32>
    %cst = arith.constant dense<0xFF800000> : vector<256xf32>
    %5 = vector.multi_reduction <maximumf>, %4, %cst [0] : vector<4x256xf32> to vector<256xf32>
    %6 = vector.shape_cast %5 : vector<256xf32> to vector<1x256xf32>
    %7 = vector.broadcast %6 : vector<1x256xf32> to vector<4x256xf32>
    %8 = arith.subf %4, %7 : vector<4x256xf32>
    %9 = math.exp %8 : vector<4x256xf32>
    %cst_3 = arith.constant dense<0.000000e+00> : vector<256xf32>
    %10 = vector.multi_reduction <add>, %9, %cst_3 [0] : vector<4x256xf32> to vector<256xf32>
    %11 = vector.shape_cast %10 : vector<256xf32> to vector<1x256xf32>
    %c0_4 = arith.constant 0 : index
    %c0_5 = arith.constant 0 : index
    %c0_6 = arith.constant 0 : index
    %12 = vector.load %arg4[%c0_4, %c0_5, %c0_6] : memref<1x4x256xf32, #tpu.memory_space<vmem>>, vector<1x4x256xf32>
    %13 = vector.shape_cast %12 : vector<1x4x256xf32> to vector<4x256xf32>
    %14 = arith.mulf %13, %4 : vector<4x256xf32>
    %cst_7 = arith.constant dense<0.000000e+00> : vector<256xf32>
    %15 = vector.multi_reduction <add>, %14, %cst_7 [0] : vector<4x256xf32> to vector<256xf32>
    %16 = vector.shape_cast %15 : vector<256xf32> to vector<1x256xf32>
    %17 = arith.subf %6, %16 : vector<1x256xf32>
    %18 = math.log %11 : vector<1x256xf32>
    %19 = arith.addf %17, %18 : vector<1x256xf32>
    %cst_8 = arith.constant 0.000000e+00 : f32
    %20 = vector.broadcast %cst_8 : f32 to vector<1x256xf32>
    %21 = arith.subf %20, %19 : vector<1x256xf32>
    %22 = math.exp %21 : vector<1x256xf32>
    %cst_9 = arith.constant 1.000000e+00 : f32
    %23 = vector.broadcast %cst_9 : f32 to vector<1x256xf32>
    %24 = arith.subf %23, %22 : vector<1x256xf32>
    %cst_10 = arith.constant 0.000000e+00 : f32
    %25 = vector.broadcast %cst_10 : f32 to vector<1x256xf32>
    %26 = arith.maximumf %24, %25 : vector<1x256xf32>
    %27 = math.sqrt %26 : vector<1x256xf32>
    %28 = arith.mulf %26, %27 : vector<1x256xf32>
    %cst_11 = arith.constant 2.500000e-01 : f32
    %29 = vector.broadcast %cst_11 : f32 to vector<1x256xf32>
    %30 = arith.mulf %29, %28 : vector<1x256xf32>
    %31 = arith.mulf %30, %19 : vector<1x256xf32>
    %c0_12 = arith.constant 0 : index
    %c0_13 = arith.constant 0 : index
    %32 = vector.load %arg6[%c0_12, %c0_13] : memref<1x256xf32, #tpu.memory_space<vmem>>, vector<1x256xf32>
    %33 = arith.addf %32, %31 : vector<1x256xf32>
    %c0_14 = arith.constant 0 : index
    %c0_15 = arith.constant 0 : index
    %34 = vector.load %arg6[%c0_14, %c0_15] : memref<1x256xf32, #tpu.memory_space<vmem>>, vector<1x256xf32>
    tpu.vector_store %arg6[%c0_14, %c0_15], %33 {strides = array<i32>} : memref<1x256xf32, #tpu.memory_space<vmem>>, vector<1x256xf32>,
    %c0_i32_16 = arith.constant 0 : i32
    %35 = arith.cmpi eq, %arg2, %c0_i32_16 : i32
    %36 = arith.extui %35 : i1 to i32
    %c0_i32_17 = arith.constant 0 : i32
    %37 = arith.cmpi ne, %36, %c0_i32_17 : i32
    scf.if %37 {
      %c0_18 = arith.constant 0 : index
      %c0_19 = arith.constant 0 : index
      %38 = vector.load %arg6[%c0_18, %c0_19] : memref<1x256xf32, #tpu.memory_space<vmem>>, vector<1x256xf32>
      %39 = vector.shape_cast %38 : vector<1x256xf32> to vector<1x1x256xf32>
      %cst_20 = arith.constant dense<0.000000e+00> : vector<1xf32>
      %40 = vector.multi_reduction <add>, %39, %cst_20 [1, 2] : vector<1x1x256xf32> to vector<1xf32>
      %41 = vector.shape_cast %40 : vector<1xf32> to vector<1x1x1xf32>
      %42 = vector.extract %41[0, 0, 0] : f32 from vector<1x1x1xf32>
      %43 = vector.broadcast %42 : f32 to vector<1x1x8x128xf32>
      %c0_21 = arith.constant 0 : index
      %c0_22 = arith.constant 0 : index
      %c0_23 = arith.constant 0 : index
      %c0_24 = arith.constant 0 : index
      %44 = vector.load %arg5[%c0_21, %c0_22, %c0_23, %c0_24] : memref<1x1x8x128xf32, #tpu.memory_space<vmem>>, vector<1x1x8x128xf32>
      tpu.vector_store %arg5[%c0_21, %c0_22, %c0_23, %c0_24], %43 {strides = array<i32>} : memref<1x1x8x128xf32, #tpu.memory_space<vmem>>, vector<1x1x8x128xf32>,
    } else {
    }
    return
  }
  func.func @transform_0(%arg0: i32, %arg1: i32, %arg2: i32) -> (i32, i32, i32) {
    %c1_i32 = arith.constant 1 : i32
    %0 = arith.muli %arg1, %c1_i32 : i32
    %1 = arith.addi %0, %arg2 : i32
    %c0_i32 = arith.constant 0 : i32
    %c0_i32_0 = arith.constant 0 : i32
    return %arg0, %c0_i32, %1 : i32, i32, i32
  }
  func.func @transform_1(%arg0: i32, %arg1: i32, %arg2: i32) -> (i32, i32, i32) {
    %c1_i32 = arith.constant 1 : i32
    %0 = arith.muli %arg1, %c1_i32 : i32
    %1 = arith.addi %0, %arg2 : i32
    %c0_i32 = arith.constant 0 : i32
    %c0_i32_0 = arith.constant 0 : i32
    return %arg0, %c0_i32, %1 : i32, i32, i32
  }
  func.func @transform_2(%arg0: i32, %arg1: i32, %arg2: i32) -> (i32, i32, i32, i32) {
    %c0_i32 = arith.constant 0 : i32
    %c0_i32_0 = arith.constant 0 : i32
    %c0_i32_1 = arith.constant 0 : i32
    return %arg0, %arg1, %c0_i32, %c0_i32_0 : i32, i32, i32, i32
  }
}

</mosaic_0001>

<llo_original>
// kernel: tpu_custom_call.1
$region0: #{tpu_custom_call.1}
  #allocation0 [shape = 'u32[]', space=smem, size = 0x4, offset = 0x4, fixed_abs, tag = 'smem constant byte address 0x4 - core index']
  #allocation1 [shape = 'u32[144,128]{1,0:T(1,128)}', space=vmem, size = 0x12000, scoped, tag = 'internal scratch']
  #allocation2 [shape = 'f32[1,256]{1,0:T(1,128)}', space=vmem, size = 0x400, scoped, tag = 'scratch operand']
  %s0 = inlined_call_operand.hbm [shape: f32[2,4,256], index: 0, kind: input, shape index: {}]
  %s1 = inlined_call_operand.hbm [shape: f32[2,4,256], index: 1, kind: input, shape index: {}]
  %s2 = inlined_call_operand.hbm [shape: f32[2,1,8,128], index: 2, kind: output, shape index: {}]
  %s3 = sld [smem:[#allocation0]]
  $region57: #{tpu_custom_call.1} parent=0
    _
  %s5 = ssub.s32 1, %s3
  %s6 = scalar_select 0, %s5, %s3
  $region1: #{tpu_custom_call.1} parent=0
    #allocation3 [shape = 'u8[8192]{0}', space=vmem, size = 0x2000, scoped, tag = 'input window, operand 0']
    #allocation4 [shape = 's32[2]{0}', space=sflag, size = 0x8, scoped, tag = 'scoped memory for tpu_custom_call.1']
    #allocation5 [shape = 's32[2]{0}', space=sflag, size = 0x8, scoped, tag = 'scoped memory for tpu_custom_call.1']
    #allocation6 [shape = 'u8[8192]{0}', space=vmem, size = 0x2000, scoped, tag = 'input window, operand 1']
    #allocation7 [shape = 's32[2]{0}', space=sflag, size = 0x8, scoped, tag = 'scoped memory for tpu_custom_call.1']
    #allocation8 [shape = 'u8[8192]{0}', space=vmem, size = 0x2000, scoped, tag = 'output window, operand 0']
    %7 = vsyncpa [#allocation4], 0
    %s8 = scalar_lea.sflag [#allocation4], 1
    %9 = vsyncpa %s8, 0
    %10 = vsyncpa [#allocation7], 0
    %s11 = scalar_lea.sflag [#allocation7], 1
    %12 = vsyncpa %s11, 0
    %13 = vsyncpa [#allocation5], 0
    %s14 = scalar_lea.sflag [#allocation5], 1
    %15 = vsyncpa %s14, 0
    loop: start=0, step=1, limit=4
    $region2: #{tpu_custom_call.1} parent=1 // loop_pre_header
      _
    $region3: #{tpu_custom_call.1} parent=1 // loop_header
      %s17 = sphi 0, %s21
      %p18 = scmp.ge.s32.totalorder %s17, 4
      %s24 = sphi 0, %s43
      %s25 = sphi 0, %s39
      %s26 = sphi 0, %s35
      %s27 = sphi 0, %s24
      %s28 = sphi 0, %s25
      %s29 = sphi 0, %s26
      %s30 = sphi 0, %s27
      %s31 = sphi 0, %s28
      %s32 = sphi 0, %s29
      %s50 = sphi 0, %s52
      %s53 = sphi 0, %s50
      %s54 = sphi 0, %s53
      %s70 = sphi 0, %s54
      %s80 = sphi 0, %s82
      %s83 = sphi 0, %s80
      %s84 = sphi 0, %s83
      %s100 = sphi 0, %s84
      %s108 = sphi 0, %s110
      %s111 = sphi 0, %s108
      %s112 = sphi 0, %s111
      %s128 = sphi 0, %s112
    $region4: #{tpu_custom_call.1} parent=1 // loop_header_branch
      %20 = sbr.rel (%p18) target = $region8
    $region5: #{tpu_custom_call.1} parent=1 // loop_body
      %s22 = ssub.s32 %s17, 1
      %s23 = ssub.s32 %s17, 2
      %s33 = sadd.s32 1, %s26
      %p34 = scmp.ge.s32.totalorder %s33, 1
      %s35 = scalar_select %p34, 0, %s33
      %s36 = sadd.s32 1, %s25
      %s37 = scalar_select %p34, %s36, %s25
      %p38 = scmp.ge.s32.totalorder %s37, 1
      %s39 = scalar_select %p38, 0, %s37
      %s40 = sadd.s32 1, %s24
      %s41 = scalar_select %p38, %s40, %s24
      %p42 = scmp.ge.s32.totalorder %s41, 2
      %s43 = scalar_select %p42, 0, %s41
      %s44 = sadd.s32 %s25, %s26
      %s45 = sadd.s32 %s39, %s35
      %s46 = ssub.s32 %s24, %s43
      %s47 = ssub.s32 %s44, %s45
      %s48 = sor.u32 %s46, %s47
      %p49 = scmp.eq.s32.totalorder %s48, 0
      %s51 = sadd.s32 %s50, 1
      %s52 = scalar_select %p49, %s50, %s51
      %p55 = pneg %p49
      %p56 = scmp.eq.s32.totalorder %s17, 1
      %p57 = por %p55, %p56
      %p58 = scmp.ne.s32.totalorder %s50, %s53
      %p59 = scmp.eq.s32.totalorder %s17, 0
      %p60 = por %p58, %p59
      %p61 = scmp.ne.s32.totalorder %s50, %s53
      %p62 = scmp.eq.s32.totalorder %s22, 1
      %p63 = por %p61, %p62
      %p64 = scmp.ne.s32.totalorder %s53, %s54
      %p65 = scmp.eq.s32.totalorder %s22, 0
      %p66 = por %p64, %p65
      %p67 = scmp.ne.s32.totalorder %s53, %s54
      %p68 = scmp.eq.s32.totalorder %s23, 1
      %p69 = por %p67, %p68
      %p71 = scmp.ne.s32.totalorder %s54, %s70
      %p72 = scmp.eq.s32.totalorder %s23, 0
      %p73 = por %p71, %p72
      %s74 = sadd.s32 %s25, %s26
      %s75 = sadd.s32 %s39, %s35
      %s76 = ssub.s32 %s24, %s43
      %s77 = ssub.s32 %s74, %s75
      %s78 = sor.u32 %s76, %s77
      %p79 = scmp.eq.s32.totalorder %s78, 0
      %s81 = sadd.s32 %s80, 1
      %s82 = scalar_select %p79, %s80, %s81
      %p85 = pneg %p79
      %p86 = scmp.eq.s32.totalorder %s17, 1
      %p87 = por %p85, %p86
      %p88 = scmp.ne.s32.totalorder %s80, %s83
      %p89 = scmp.eq.s32.totalorder %s17, 0
      %p90 = por %p88, %p89
      %p91 = scmp.ne.s32.totalorder %s80, %s83
      %p92 = scmp.eq.s32.totalorder %s22, 1
      %p93 = por %p91, %p92
      %p94 = scmp.ne.s32.totalorder %s83, %s84
      %p95 = scmp.eq.s32.totalorder %s22, 0
      %p96 = por %p94, %p95
      %p97 = scmp.ne.s32.totalorder %s83, %s84
      %p98 = scmp.eq.s32.totalorder %s23, 1
      %p99 = por %p97, %p98
      %p101 = scmp.ne.s32.totalorder %s84, %s100
      %p102 = scmp.eq.s32.totalorder %s23, 0
      %p103 = por %p101, %p102
      %s104 = ssub.s32 %s24, %s43
      %s105 = ssub.s32 %s25, %s39
      %s106 = sor.u32 %s104, %s105
      %p107 = scmp.eq.s32.totalorder %s106, 0
      %s109 = sadd.s32 %s108, 1
      %s110 = scalar_select %p107, %s108, %s109
      %p113 = pneg %p107
      %p114 = scmp.eq.s32.totalorder %s17, 1
      %p115 = por %p113, %p114
      %p116 = scmp.ne.s32.totalorder %s108, %s111
      %p117 = scmp.eq.s32.totalorder %s17, 0
      %p118 = por %p116, %p117
      %p119 = scmp.ne.s32.totalorder %s108, %s111
      %p120 = scmp.eq.s32.totalorder %s22, 1
      %p121 = por %p119, %p120
      %p122 = scmp.ne.s32.totalorder %s111, %s112
      %p123 = scmp.eq.s32.totalorder %s22, 0
      %p124 = por %p122, %p123
      %p125 = scmp.ne.s32.totalorder %s111, %s112
      %p126 = scmp.eq.s32.totalorder %s23, 1
      %p127 = por %p125, %p126
      %p129 = scmp.ne.s32.totalorder %s112, %s128
      %p130 = scmp.eq.s32.totalorder %s23, 0
      %p131 = por %p129, %p130
      %p132 = scmp.le.s32.totalorder 1, %s17
      %p133 = scmp.lt.s32.totalorder %s17, 3
      %p134 = pnand %p132, %p133
      %p135 = pneg %p134
      // Predicated region
      $region9: #{tpu_custom_call.1} parent=5 // pred_check
        _
      $region10: #{tpu_custom_call.1} parent=5 // pred_check_branch
        %137 = sbr.rel (%p134) target = $region12
      $region11: #{tpu_custom_call.1} parent=5 // pred_region
        %s138 = ssub.s32 %s17, 1
      $region12: #{tpu_custom_call.1} parent=5 // pred_fallthru
        _
      %p139 = scmp.lt.s32.totalorder %s17, 2
      // Predicated region
      $region13: #{tpu_custom_call.1} parent=5 // pred_check
        %p140 = pneg %p139
      $region14: #{tpu_custom_call.1} parent=5 // pred_check_branch
        %142 = sbr.rel (%p140) target = $region16
      $region15: #{tpu_custom_call.1} parent=5 // pred_region
        // Predicated region
        $region17: #{tpu_custom_call.1} parent=15 // pred_check
          %p143 = pneg %p60
        $region18: #{tpu_custom_call.1} parent=15 // pred_check_branch
          %145 = sbr.rel (%p143) target = $region20
        $region19: #{tpu_custom_call.1} parent=15 // pred_region
          %s146 = sand.u32 %s50, 1
          %s147 = scalar_lea.sflag [#allocation4], %s146
          %s148 = sand.u32 %s50, 1
          %s149 = smul.addr %s148, 8
          %s150 = scalar_lea.vmem [#allocation3], %s149
          %s151 = sadd.s32 %s25, %s26
          %s152 = smul.u32 2, %s151
          %s154 = ssub.s32 128, 128
          %155 = vsyncadd %s147, %s154
          %s156 = smul.addr %s24, 2
          %s157 = sadd.s32 %s152, %s156
          %s158 = smul.addr %s157, 64
          %s159 = scalar_lea.hbm %s0, %s158
          %s161 = sshll.u32 %s150, 4
          %s162 = int_to_ptr.vmem [resolvable:$true] %s161
          %164 = dma.hbm_to_vmem [thread:$0]  %s159, 128, %s162, %s147
        $region20: #{tpu_custom_call.1} parent=15 // pred_fallthru
          _
        // Predicated region
        $region21: #{tpu_custom_call.1} parent=15 // pred_check
          %p165 = pneg %p90
        $region22: #{tpu_custom_call.1} parent=15 // pred_check_branch
          %167 = sbr.rel (%p165) target = $region24
        $region23: #{tpu_custom_call.1} parent=15 // pred_region
          %s168 = sand.u32 %s80, 1
          %s169 = scalar_lea.sflag [#allocation7], %s168
          %s170 = sand.u32 %s80, 1
          %s171 = smul.addr %s170, 8
          %s172 = scalar_lea.vmem [#allocation6], %s171
          %s173 = sadd.s32 %s25, %s26
          %s174 = smul.u32 2, %s173
          %s176 = ssub.s32 128, 128
          %177 = vsyncadd %s169, %s176
          %s178 = smul.addr %s24, 2
          %s179 = sadd.s32 %s174, %s178
          %s180 = smul.addr %s179, 64
          %s181 = scalar_lea.hbm %s1, %s180
          %s183 = sshll.u32 %s172, 4
          %s184 = int_to_ptr.vmem [resolvable:$true] %s183
          %186 = dma.hbm_to_vmem [thread:$0]  %s181, 128, %s184, %s169
        $region24: #{tpu_custom_call.1} parent=15 // pred_fallthru
          _
      $region16: #{tpu_custom_call.1} parent=5 // pred_fallthru
        _
      %p187 = scmp.le.s32.totalorder 1, %s17
      %p188 = scmp.lt.s32.totalorder %s17, 3
      %p189 = pnand %p187, %p188
      %p190 = pneg %p189
      // Predicated region
      $region25: #{tpu_custom_call.1} parent=5 // pred_check
        _
      $region26: #{tpu_custom_call.1} parent=5 // pred_check_branch
        %192 = sbr.rel (%p189) target = $region28
      $region27: #{tpu_custom_call.1} parent=5 // pred_region
        %s193 = ssub.s32 %s17, 1
        %s194 = sand.u32 %s53, 1
        %s195 = scalar_lea.sflag [#allocation4], %s194
        %s196 = sand.u32 %s53, 1
        %s197 = smul.addr %s196, 8
        %s198 = scalar_lea.vmem [#allocation3], %s197
        // Predicated region
        $region29: #{tpu_custom_call.1} parent=27 // pred_check
          %p199 = pneg %p66
        $region30: #{tpu_custom_call.1} parent=27 // pred_check_branch
          %201 = sbr.rel (%p199) target = $region32
        $region31: #{tpu_custom_call.1} parent=27 // pred_region
          %202 = dma.done %s195, 128
        $region32: #{tpu_custom_call.1} parent=27 // pred_fallthru
          _
        %s203 = sand.u32 %s83, 1
        %s204 = scalar_lea.sflag [#allocation7], %s203
        %s205 = sand.u32 %s83, 1
        %s206 = smul.addr %s205, 8
        %s207 = scalar_lea.vmem [#allocation6], %s206
        // Predicated region
        $region33: #{tpu_custom_call.1} parent=27 // pred_check
          %p208 = pneg %p96
        $region34: #{tpu_custom_call.1} parent=27 // pred_check_branch
          %210 = sbr.rel (%p208) target = $region36
        $region35: #{tpu_custom_call.1} parent=27 // pred_region
          %211 = dma.done %s204, 128
        $region36: #{tpu_custom_call.1} parent=27 // pred_fallthru
          _
        %s212 = sand.u32 %s53, 1
        %s213 = scalar_lea.sflag [#allocation4], %s212
        %s214 = sand.u32 %s53, 1
        %s215 = smul.addr %s214, 8
        %s216 = scalar_lea.vmem [#allocation3], %s215
        %p217 = pneg %p66
        %p218 = pneg %p63
        %s219 = sand.u32 %s83, 1
        %s220 = scalar_lea.sflag [#allocation7], %s219
        %s221 = sand.u32 %s83, 1
        %s222 = smul.addr %s221, 8
        %s223 = scalar_lea.vmem [#allocation6], %s222
        %p224 = pneg %p96
        %p225 = pneg %p93
        %p226 = pneg %p124
        %p227 = pneg %p121
        %s228 = sand.u32 %s111, 1
        %s229 = scalar_lea.sflag [#allocation5], %s228
        %s230 = sand.u32 %s111, 1
        %s231 = smul.addr %s230, 8
        %s232 = scalar_lea.vmem [#allocation8], %s231
        %s233 = sadd.s32 %s28, %s29
        %s234 = smul.u32 2, %s233
        %s235 = sadd.s32 %s28, %s29
        %s236 = smul.u32 2, %s235
        %p237 = scmp.eq.s32.totalorder %s29, 0
        // Predicated region
        $region37: #{tpu_custom_call.1} parent=27 // pred_check
          %p238 = pneg %p237
        $region38: #{tpu_custom_call.1} parent=27 // pred_check_branch
          %240 = sbr.rel (%p238) target = $region40
        $region39: #{tpu_custom_call.1} parent=27 // pred_region
          %v241 = vlaneseq
          %vm242 = vcmp.ge.s32.totalorder %v241, 0
          %vm243 = vcmp.lt.s32.totalorder %v241, 256
          %vm244 = vmand %vm242, %vm243
          %245 = vst.msk [vmem:[#allocation2] sm:$0x3] %vm244, 0.0
        $region40: #{tpu_custom_call.1} parent=27 // pred_fallthru
          _
        %v246 = vld [vmem:[%s198] sm:$0xff]
        %v248 = vcombine.high %v246, %v246
        %vm250 = vcmask 1043456
        %v251 = vsel %vm250, %v246, -inf
        %v252 = vrot.slane %v251, 4
        %v253 = vmax.f32 %v251, %v252
        %v254 = vrot.slane %v253, 2
        %v255 = vmax.f32 %v253, %v254
        %v256 = vrot.slane %v255, 1
        %v257 = vmax.f32 %v255, %v256
        %v258 = vsel %vm250, %v248, -inf
        %v259 = vrot.slane %v258, 4
        %v260 = vmax.f32 %v258, %v259
        %v261 = vrot.slane %v260, 2
        %v262 = vmax.f32 %v260, %v261
        %v263 = vrot.slane %v262, 1
        %v264 = vmax.f32 %v262, %v263
        %v267 = vcombine.low %v257, %v264
        %v269 = vsub.f32 %v246, %v267
        %v270 = vmul.f32 %v269, 1.442695
        %v271 = vpow.pop %v270
        %v273 = vcombine.high %v271, %v271
        %v275 = vsel %vm250, %v271, 0.0
        %v276 = vrot.slane %v275, 4
        %v277 = vadd.f32 %v275, %v276
        %v278 = vrot.slane %v277, 2
        %v279 = vadd.f32 %v277, %v278
        %v280 = vrot.slane %v279, 1
        %v281 = vadd.f32 %v279, %v280
        %v282 = vsel %vm250, %v273, 0.0
        %v283 = vrot.slane %v282, 4
        %v284 = vadd.f32 %v282, %v283
        %v285 = vrot.slane %v284, 2
        %v286 = vadd.f32 %v284, %v285
        %v287 = vrot.slane %v286, 1
        %v288 = vadd.f32 %v286, %v287
        %v289 = vld [vmem:[%s207] sm:$0xff]
        %v290 = vmul.f32 %v289, %v246
        %v292 = vcombine.high %v290, %v290
        %v294 = vsel %vm250, %v290, 0.0
        %v295 = vrot.slane %v294, 4
        %v296 = vadd.f32 %v294, %v295
        %v297 = vrot.slane %v296, 2
        %v298 = vadd.f32 %v296, %v297
        %v299 = vrot.slane %v298, 1
        %v300 = vadd.f32 %v298, %v299
        %v301 = vsel %vm250, %v292, 0.0
        %v302 = vrot.slane %v301, 4
        %v303 = vadd.f32 %v301, %v302
        %v304 = vrot.slane %v303, 2
        %v305 = vadd.f32 %v303, %v304
        %v306 = vrot.slane %v305, 1
        %v307 = vadd.f32 %v305, %v306
        %v308 = vsub.f32 %v257, %v300
        %v309 = vsub.f32 %v264, %v307
        %v310 = vlog2.pop %v281
        %v311 = vmul.f32 %v310, 0.6931472
        %v312 = vlog2.pop %v288
        %v313 = vmul.f32 %v312, 0.6931472
        %v314 = vadd.f32 %v308, %v311
        %v315 = vadd.f32 %v309, %v313
        %v316 = vsub.f32 0.0, %v314
        %v317 = vsub.f32 0.0, %v315
        %v318 = vmul.f32 %v316, 1.442695
        %v319 = vpow.pop %v318
        %v320 = vmul.f32 %v317, 1.442695
        %v321 = vpow.pop %v320
        %v322 = vsub.f32 1.0, %v319
        %v323 = vsub.f32 1.0, %v321
        %v324 = vmax.f32 %v322, 0.0
        %v325 = vmax.f32 %v323, 0.0
        %v326 = vrsqrt.pop %v324
        %v327 = vmul.f32 %v324, %v326
        %vm328 = vcmp.eq.f32.partialorder %v324, inf
        %v329 = vsel %vm328, %v324, %v327
        %vm330 = vcmp.eq.f32.partialorder %v324, 0.0
        %v331 = vand.u32 %v324, 2147483648
        %v332 = vsel %vm330, %v331, %v329
        %v333 = vrsqrt.pop %v325
        %v334 = vmul.f32 %v325, %v333
        %vm335 = vcmp.eq.f32.partialorder %v325, inf
        %v336 = vsel %vm335, %v325, %v334
        %vm337 = vcmp.eq.f32.partialorder %v325, 0.0
        %v338 = vand.u32 %v325, 2147483648
        %v339 = vsel %vm337, %v338, %v336
        %v340 = vmul.f32 %v324, %v332
        %v341 = vmul.f32 %v325, %v339
        %v342 = vmul.f32 %v340, 0.25
        %v343 = vmul.f32 %v341, 0.25
        %v344 = vmul.f32 %v342, %v314
        %v345 = vmul.f32 %v343, %v315
        %v346 = vld [vmem:[#allocation2] sm:$0x3]
        %v349 = vcombine.low %v344, %v345
        %v351 = vunpack.c.l.s4 1966171168
        %v352 = vunpack.c.0.s8 %v351
        %v353 = vlaneseq
        %v354 = vshrl.u32 %v353, 7
        %v355 = vsub.s32 %v352, %v354
        %v356 = vrot.slane %v349, %v355
        %v358 = vunpack.c.l.s4 1966171168
        %v359 = vunpack.c.0.s8 %v358
        %v360 = vlaneseq
        %v361 = vshrl.u32 %v360, 7
        %v362 = vsub.s32 %v359, %v361
        %v363 = vrot.slane %v356, %v362
        %v365 = vadd.f32 %v346, %v363
        %v366 = vlaneseq
        %vm367 = vcmp.ge.s32.totalorder %v366, 0
        %vm368 = vcmp.lt.s32.totalorder %v366, 256
        %vm369 = vmand %vm367, %vm368
        %370 = vst.msk [vmem:[#allocation2] sm:$0x3] %vm369, %v365
        // Predicated region
        $region41: #{tpu_custom_call.1} parent=27 // pred_check
          %p371 = pneg %p237
        $region42: #{tpu_custom_call.1} parent=27 // pred_check_branch
          %373 = sbr.rel (%p371) target = $region44
        $region43: #{tpu_custom_call.1} parent=27 // pred_region
          %v374 = vld [vmem:[#allocation2] sm:$0x3]
          %v376 = vlaneseq
          %v377 = vshrl.u32 %v376, 7
          %v378 = vsub.s32 0, %v377
          %v379 = vrot.slane %v374, %v378
          %v380 = vlaneseq
          %v381 = vshrl.u32 %v380, 7
          %v382 = vsub.s32 1, %v381
          %v383 = vrot.slane %v374, %v382
          %vm386 = vcmask 1040384
          %v387 = vsel %vm386, %v379, 0.0
          %v388 = vsel %vm386, %v383, 0.0
          %v389 = vadd.f32 %v387, %v388
          %390 = vadd.xlane.f32.xlu0 %v389
          %v391 = vpop.xlane.xlu0 %390
          %v392 = vrot.slane %v391, 4
          %v393 = vadd.f32 %v391, %v392
          %v394 = vrot.slane %v393, 2
          %v395 = vadd.f32 %v393, %v394
          %v396 = vrot.slane %v395, 1
          %v397 = vadd.f32 %v395, %v396
          %s398 = vtos %v397
          %v399 = vstv %s398
          %400 = vst [vmem:[%s232] sm:$0xff] %v399
        $region44: #{tpu_custom_call.1} parent=27 // pred_fallthru
          _
        %s401 = sand.u32 %s111, 1
        %s402 = scalar_lea.sflag [#allocation5], %s401
        %s403 = sand.u32 %s111, 1
        %s404 = smul.addr %s403, 8
        %s405 = scalar_lea.vmem [#allocation8], %s404
        // Predicated region
        $region45: #{tpu_custom_call.1} parent=27 // pred_check
          %p406 = pneg %p121
        $region46: #{tpu_custom_call.1} parent=27 // pred_check_branch
          %408 = sbr.rel (%p406) target = $region48
        $region47: #{tpu_custom_call.1} parent=27 // pred_region
          %s410 = ssub.s32 128, 128
          %411 = vsyncadd %s402, %s410
          %s412 = sadd.s32 %s28, %s27
          %s413 = smul.addr %s412, 128
          %s414 = scalar_lea.hbm %s2, %s413
          %s416 = sshll.u32 %s405, 4
          %s417 = int_to_ptr.vmem [resolvable:$true] %s416
          %419 = dma.vmem_to_hbm [thread:$0]  %s417, 128, %s414, %s402
        $region48: #{tpu_custom_call.1} parent=27 // pred_fallthru
          _
      $region28: #{tpu_custom_call.1} parent=5 // pred_fallthru
        _
      %p420 = scmp.le.s32.totalorder 2, %s17
      // Predicated region
      $region49: #{tpu_custom_call.1} parent=5 // pred_check
        %p421 = pneg %p420
      $region50: #{tpu_custom_call.1} parent=5 // pred_check_branch
        %423 = sbr.rel (%p421) target = $region52
      $region51: #{tpu_custom_call.1} parent=5 // pred_region
        %s424 = ssub.s32 %s17, 2
        // Predicated region
        $region53: #{tpu_custom_call.1} parent=51 // pred_check
          %p425 = pneg %p127
        $region54: #{tpu_custom_call.1} parent=51 // pred_check_branch
          %427 = sbr.rel (%p425) target = $region56
        $region55: #{tpu_custom_call.1} parent=51 // pred_region
          %s428 = sand.u32 %s112, 1
          %s429 = scalar_lea.sflag [#allocation5], %s428
          %s430 = sand.u32 %s112, 1
          %s431 = smul.addr %s430, 8
          %s432 = scalar_lea.vmem [#allocation8], %s431
          %433 = dma.done %s429, 128
        $region56: #{tpu_custom_call.1} parent=51 // pred_fallthru
          _
      $region52: #{tpu_custom_call.1} parent=5 // pred_fallthru
        _
    $region6: #{tpu_custom_call.1} parent=1 // loop_footer
      %s21 = sadd.s32 1, %s17
    $region7: #{tpu_custom_call.1} parent=1 // loop_footer_branch
      %16 = sbr.rel target = $region3
    $region8: #{tpu_custom_call.1} parent=1 // loop_exit
      _
    %434 = vsyncpa [#allocation4], 1
    %s435 = scalar_lea.sflag [#allocation4], 1
    %436 = vsyncpa %s435, 1
    %437 = vsyncpa [#allocation7], 1
    %s438 = scalar_lea.sflag [#allocation7], 1
    %439 = vsyncpa %s438, 1
    %440 = vsyncpa [#allocation5], 1
    %s441 = scalar_lea.sflag [#allocation5], 1
    %442 = vsyncpa %s441, 1

</llo_original>
